<compile_context>
chip_gen: v6e
topology: v6e:2x2x1
jax: 0.10.0
libtpu: 0.0.40
codegen_flags: <defaults>
</compile_context>

<pallas_src>
import functools

import jax
import jax.numpy as jnp
from jax.experimental import pallas as pl
from jax.experimental.pallas import tpu as pltpu


_LANES = 128
# yp-tile + yhp-tile bytes per grid step; x2 pipeline buffers ~= 16 MiB resident.
_DEFAULT_PAIR_TILE_BYTES = 8 * 1024 * 1024
_VMEM_LIMIT_BYTES = 32 * 1024 * 1024  # safe on v5e(16 default)/v6e(32)/v7x(64 phys)


def _round_up(x, m):
    return ((x + m - 1) // m) * m


def _sublane_multiple(*dtypes):
    """Packed-row sublane multiple: f32 -> 8, bf16 -> 16, int8/fp8 -> 32."""
    min_itemsize = min(jnp.dtype(d).itemsize for d in dtypes)
    return (4 // max(1, min_itemsize)) * 8


def _policy_tile_kernel(yp_ref, yhp_ref, out_ref, *, B, P, tb, tp,
                        need_row_mask, need_col_mask):
    """Accumulate sum(y_hat_policy * log(1e-10 + y_policy)) for one batch tile."""
    i = pl.program_id(0)
    j = pl.program_id(1)

    # Output block is resident across the (arbitrary) P-chunk axis: init at j==0.
    @pl.when(j == 0)
    def _():
        out_ref[...] = jnp.zeros_like(out_ref)

    # Upcast in-kernel: inputs travel over HBM in their native dtype.
    yp = yp_ref[...].astype(jnp.float32)
    yhp = yhp_ref[...].astype(jnp.float32)

    # Mask ragged tails (no wrapper-side padding).  Masked yp -> 1.0 keeps the
    # log finite; masked yhp -> 0.0 zeroes the contribution exactly.
    if need_row_mask or need_col_mask:
        mask = None
        if need_row_mask:
            rows = jax.lax.broadcasted_iota(jnp.int32, (tb, tp), 0) + i * tb
            mask = rows < B
        if need_col_mask:
            cols = jax.lax.broadcasted_iota(jnp.int32, (tb, tp), 1) + j * tp
            cmask = cols < P
            mask = cmask if mask is None else jnp.logical_and(mask, cmask)
        yp = jnp.where(mask, yp, jnp.float32(1.0))
        yhp = jnp.where(mask, yhp, jnp.float32(0.0))

    partial = jnp.sum(yhp * jnp.log(jnp.float32(1e-10) + yp))
    # Lane-dense, tile-aligned (8,128) accumulator block.
    out_ref[...] += partial


def alpha_loss(y_winner, y_hat_winner, y_policy, y_hat_policy, *,
               pair_tile_bytes=_DEFAULT_PAIR_TILE_BYTES):
    """AlphaZero loss; policy cross-entropy term computed by a Pallas kernel."""
    B, P = y_policy.shape
    assert y_hat_policy.shape == (B, P)

    pair_bytes = (jnp.dtype(y_policy.dtype).itemsize
                  + jnp.dtype(y_hat_policy.dtype).itemsize)
    sub = _sublane_multiple(y_policy.dtype, y_hat_policy.dtype)

    # ---- P (lane) tiling: only if even a single sub-row slab of full P blows
    # the byte budget (guards VMEM for arbitrarily wide policy heads).
    if P * sub * pair_bytes <= pair_tile_bytes:
        tp = P                      # full-dim block: no 128-divisibility needed
    else:
        tp = max(_LANES, (pair_tile_bytes // (sub * pair_bytes)) // _LANES * _LANES)
    num_p = pl.cdiv(P, tp)

    # ---- batch (sublane) tiling from the byte budget.
    tb = (pair_tile_bytes // (tp * pair_bytes)) // sub * sub
    tb = max(sub, tb)
    tb = min(tb, _round_up(B, sub))
    # Keep >= 2 batch tiles when B permits so the "parallel" axis splits across
    # both TensorCores on v7x.
    if B > sub:
        tb = min(tb, _round_up(pl.cdiv(B, 2), sub))
    num_b = pl.cdiv(B, tb)

    need_row_mask = (B % tb) != 0
    need_col_mask = (num_p > 1) and ((P % tp) != 0)

    kernel = functools.partial(
        _policy_tile_kernel, B=B, P=P, tb=tb, tp=tp,
        need_row_mask=need_row_mask, need_col_mask=need_col_mask)

    cost = pl.CostEstimate(
        flops=3 * B * P,
        transcendentals=B * P,
        bytes_accessed=B * P * pair_bytes + num_b * 8 * _LANES * 4,
    )

    partials = pl.pallas_call(
        kernel,
        out_shape=jax.ShapeDtypeStruct((num_b * 8, _LANES), jnp.float32),
        grid=(num_b, num_p),
        in_specs=[
            pl.BlockSpec((tb, tp), lambda i, j: (i, j)),
            pl.BlockSpec((tb, tp), lambda i, j: (i, j)),
        ],
        out_specs=pl.BlockSpec((8, _LANES), lambda i, j: (i, 0)),
        compiler_params=pltpu.CompilerParams(
            dimension_semantics=("parallel", "arbitrary"),
            vmem_limit_bytes=_VMEM_LIMIT_BYTES,
        ),
        cost_estimate=cost,
    )(y_policy, y_hat_policy)

    # Sum of per-sample policy errors over the whole (real) batch: one scalar
    # per batch tile, replicated across its (8,128) block.
    policy_sum = jnp.sum(partials[::8, 0])

    # O(B) winner MSE term: plain jnp in the wrapper — avoids a lane-sparse
    # (B,1) block inside the memory-bound kernel.
    yw = y_winner.astype(jnp.float32).reshape(-1)
    yhw = y_hat_winner.astype(jnp.float32).reshape(-1)
    winner_mean = jnp.mean((yw - yhw) ** 2)

    # mean(winner_error - policy_error) == mean(winner) - sum(policy)/B
    return winner_mean - policy_sum / jnp.float32(B)


def alpha_loss_ref(y_winner, y_hat_winner, y_policy, y_hat_policy):
    winner_error = ((y_winner.astype(jnp.float32)
                     - y_hat_winner.astype(jnp.float32)) ** 2).reshape(-1)
    policy_error = jnp.sum(
        y_hat_policy.astype(jnp.float32)
        * jnp.log(1e-10 + y_policy.astype(jnp.float32)), axis=1)
    return jnp.mean(winner_error - policy_error)


def _make_inputs(key, B, P, dtype=jnp.float32):
    k1, k2, k3, k4 = jax.random.split(key, 4)
    yw = jax.random.uniform(k1, (B, 1), jnp.float32, -1.0, 1.0)
    yhw = jax.random.uniform(k2, (B, 1), jnp.float32, -1.0, 1.0)
    yp = jax.nn.softmax(jax.random.normal(k3, (B, P), jnp.float32), axis=1).astype(dtype)
    yhp = jax.nn.softmax(jax.random.normal(k4, (B, P), jnp.float32), axis=1).astype(dtype)
    return yw, yhw, yp, yhp


if __name__ == "__main__":
    key = jax.random.PRNGKey(0)
    keys = jax.random.split(key, 4)

    # Case 1: small aligned shapes (batch=8, policy=128), single tile.
    args1 = _make_inputs(keys[0], 8, 128)
    loss1 = alpha_loss(*args1)
    jax.block_until_ready(loss1)
    assert jnp.allclose(loss1, alpha_loss_ref(*args1), atol=1e-5, rtol=1e-5), loss1

    # Case 2: ragged batch + non-128-multiple P (full-dim lane block, row mask).
    args2 = _make_inputs(keys[1], 13, 200)
    loss2 = alpha_loss(*args2)
    jax.block_until_ready(loss2)
    assert jnp.allclose(loss2, alpha_loss_ref(*args2), atol=1e-5, rtol=1e-5), loss2

    # Case 3: bf16 policies travel HBM in bf16, upcast in-kernel (sub=16 path).
    args3 = _make_inputs(keys[2], 13, 128, dtype=jnp.bfloat16)
    loss3 = alpha_loss(*args3)
    jax.block_until_ready(loss3)
    assert jnp.allclose(loss3, alpha_loss_ref(*args3), atol=1e-4, rtol=1e-4), loss3

    # Case 4: force the wide-P chunked path (tiny budget -> tp=128, num_p=3,
    # ragged P tail + ragged batch tail both masked in-kernel).
    args4 = _make_inputs(keys[3], 13, 300)
    loss4 = alpha_loss(*args4, pair_tile_bytes=2048)
    jax.block_until_ready(loss4)
    assert jnp.allclose(loss4, alpha_loss_ref(*args4), atol=1e-5, rtol=1e-5), loss4

    print("KERNEL_OK")
</pallas_src>

<mosaic_0001>
module attributes {stable_mosaic.version = 11 : i64} {
  func.func @_policy_tile_kernel(%arg0: i32, %arg1: i32, %arg2: memref<8x128xf32, #tpu.memory_space<vmem>>, %arg3: memref<8x128xf32, #tpu.memory_space<vmem>>, %arg4: memref<8x128xf32, #tpu.memory_space<vmem>>) attributes {dimension_semantics = [#tpu.dimension_semantics<parallel>, #tpu.dimension_semantics<arbitrary>], iteration_bounds = array<i64: 1, 1>, scalar_prefetch = 0 : i64, scratch_operands = 0 : i64, tpu.core_type = #tpu.core_type<tc>, window_params = [{transform_indices = @transform_0, window_bounds = array<i64: 8, 128>}, {transform_indices = @transform_1, window_bounds = array<i64: 8, 128>}, {transform_indices = @transform_2, window_bounds = array<i64: 8, 128>}]} {
    %c0_i32 = arith.constant 0 : i32
    %0 = arith.cmpi eq, %arg1, %c0_i32 : i32
    %1 = arith.extui %0 : i1 to i32
    %c0_i32_0 = arith.constant 0 : i32
    %2 = arith.cmpi ne, %1, %c0_i32_0 : i32
    scf.if %2 {
      %cst_9 = arith.constant 0.000000e+00 : f32
      %17 = vector.broadcast %cst_9 : f32 to vector<8x128xf32>
      %c0_10 = arith.constant 0 : index
      %c0_11 = arith.constant 0 : index
      %18 = vector.load %arg4[%c0_10, %c0_11] : memref<8x128xf32, #tpu.memory_space<vmem>>, vector<8x128xf32>
      tpu.vector_store %arg4[%c0_10, %c0_11], %17 {strides = array<i32>} : memref<8x128xf32, #tpu.memory_space<vmem>>, vector<8x128xf32>,
    } else {
    }
    %c0 = arith.constant 0 : index
    %c0_1 = arith.constant 0 : index
    %3 = vector.load %arg2[%c0, %c0_1] : memref<8x128xf32, #tpu.memory_space<vmem>>, vector<8x128xf32>
    %c0_2 = arith.constant 0 : index
    %c0_3 = arith.constant 0 : index
    %4 = vector.load %arg3[%c0_2, %c0_3] : memref<8x128xf32, #tpu.memory_space<vmem>>, vector<8x128xf32>
    %cst = arith.constant 1.000000e-10 : f32
    %5 = vector.broadcast %cst : f32 to vector<8x128xf32>
    %6 = arith.addf %5, %3 : vector<8x128xf32>
    %7 = math.log %6 : vector<8x128xf32>
    %8 = arith.mulf %4, %7 : vector<8x128xf32>
    %9 = vector.shape_cast %8 : vector<8x128xf32> to vector<1x8x128xf32>
    %cst_4 = arith.constant dense<0.000000e+00> : vector<1xf32>
    %10 = vector.multi_reduction <add>, %9, %cst_4 [1, 2] : vector<1x8x128xf32> to vector<1xf32>
    %11 = vector.shape_cast %10 : vector<1xf32> to vector<1x1x1xf32>
    %12 = vector.extract %11[0, 0, 0] : f32 from vector<1x1x1xf32>
    %c0_5 = arith.constant 0 : index
    %c0_6 = arith.constant 0 : index
    %13 = vector.load %arg4[%c0_5, %c0_6] : memref<8x128xf32, #tpu.memory_space<vmem>>, vector<8x128xf32>
    %14 = vector.broadcast %12 : f32 to vector<8x128xf32>
    %15 = arith.addf %13, %14 : vector<8x128xf32>
    %c0_7 = arith.constant 0 : index
    %c0_8 = arith.constant 0 : index
    %16 = vector.load %arg4[%c0_7, %c0_8] : memref<8x128xf32, #tpu.memory_space<vmem>>, vector<8x128xf32>
    tpu.vector_store %arg4[%c0_7, %c0_8], %15 {strides = array<i32>} : memref<8x128xf32, #tpu.memory_space<vmem>>, vector<8x128xf32>,
    return
  }
  func.func @transform_0(%arg0: i32, %arg1: i32) -> (i32, i32) {
    %c0_i32 = arith.constant 0 : i32
    return %arg0, %arg1 : i32, i32
  }
  func.func @transform_1(%arg0: i32, %arg1: i32) -> (i32, i32) {
    %c0_i32 = arith.constant 0 : i32
    return %arg0, %arg1 : i32, i32
  }
  func.func @transform_2(%arg0: i32, %arg1: i32) -> (i32, i32) {
    %c0_i32 = arith.constant 0 : i32
    %c0_i32_0 = arith.constant 0 : i32
    return %arg0, %c0_i32 : i32, i32
  }
}

</mosaic_0001>

<llo_original>
// kernel: tpu_custom_call.1
$region0: #{tpu_custom_call.1}
  #allocation0 [shape = 'u32[]', space=smem, size = 0x4, offset = 0x4, fixed_abs, tag = 'smem constant byte address 0x4 - core index']
  #allocation1 [shape = 'u32[144,128]{1,0:T(1,128)}', space=vmem, size = 0x12000, scoped, tag = 'internal scratch']
  %s0 = inlined_call_operand.hbm [shape: f32[8,128], index: 0, kind: input, shape index: {}]
  %s1 = inlined_call_operand.hbm [shape: f32[8,128], index: 1, kind: input, shape index: {}]
  %s2 = inlined_call_operand.hbm [shape: f32[8,128], index: 2, kind: output, shape index: {}]
  %s3 = sld [smem:[#allocation0]]
  $region30: #{tpu_custom_call.1} parent=0
    _
  %s5 = ssub.s32 1, %s3
  %s6 = scalar_select 0, %s5, %s3
  $region1: #{tpu_custom_call.1} parent=0
    #allocation2 [shape = 'u8[4096]{0}', space=vmem, size = 0x1000, scoped, tag = 'input window, operand 0, single buffered']
    #allocation3 [shape = 's32[1]{0}', space=sflag, size = 0x4, scoped, tag = 'scoped memory for tpu_custom_call.1']
    #allocation4 [shape = 's32[1]{0}', space=sflag, size = 0x4, scoped, tag = 'scoped memory for tpu_custom_call.1']
    #allocation5 [shape = 'u8[4096]{0}', space=vmem, size = 0x1000, scoped, tag = 'input window, operand 1, single buffered']
    #allocation6 [shape = 's32[1]{0}', space=sflag, size = 0x4, scoped, tag = 'scoped memory for tpu_custom_call.1']
    #allocation7 [shape = 'u8[4096]{0}', space=vmem, size = 0x1000, scoped, tag = 'output window, operand 0, single buffered']
    %7 = vsyncpa [#allocation3], 0
    %8 = vsyncpa [#allocation6], 0
    %9 = vsyncpa [#allocation4], 0
    // Predicated region
    $region2: #{tpu_custom_call.1} parent=1 // pred_check
      _
    $region3: #{tpu_custom_call.1} parent=1 // pred_check_branch
      %11 = sbr.rel (0) target = $region5
    $region4: #{tpu_custom_call.1} parent=1 // pred_region
      %s13 = ssub.s32 128, 128
      %14 = vsyncadd [#allocation3], %s13
      %s16 = sshll.u32 [#allocation2], 4
      %s17 = int_to_ptr.vmem [resolvable:$true] %s16
      %19 = dma.hbm_to_vmem [thread:$0]  %s0, 128, %s17, [#allocation3]
    $region5: #{tpu_custom_call.1} parent=1 // pred_fallthru
      _
    // Predicated region
    $region6: #{tpu_custom_call.1} parent=1 // pred_check
      _
    $region7: #{tpu_custom_call.1} parent=1 // pred_check_branch
      %21 = sbr.rel (0) target = $region9
    $region8: #{tpu_custom_call.1} parent=1 // pred_region
      %s23 = ssub.s32 128, 128
      %24 = vsyncadd [#allocation6], %s23
      %s26 = sshll.u32 [#allocation5], 4
      %s27 = int_to_ptr.vmem [resolvable:$true] %s26
      %29 = dma.hbm_to_vmem [thread:$0]  %s1, 128, %s27, [#allocation6]
    $region9: #{tpu_custom_call.1} parent=1 // pred_fallthru
      _
    // Predicated region
    $region10: #{tpu_custom_call.1} parent=1 // pred_check
      _
    $region11: #{tpu_custom_call.1} parent=1 // pred_check_branch
      %31 = sbr.rel (0) target = $region13
    $region12: #{tpu_custom_call.1} parent=1 // pred_region
      %32 = dma.done [#allocation3], 128
    $region13: #{tpu_custom_call.1} parent=1 // pred_fallthru
      _
    // Predicated region
    $region14: #{tpu_custom_call.1} parent=1 // pred_check
      _
    $region15: #{tpu_custom_call.1} parent=1 // pred_check_branch
      %34 = sbr.rel (0) target = $region17
    $region16: #{tpu_custom_call.1} parent=1 // pred_region
      %35 = dma.done [#allocation6], 128
    $region17: #{tpu_custom_call.1} parent=1 // pred_fallthru
      _
    %p36 = scmp.eq.s32.totalorder 0, 0
    // Predicated region
    $region18: #{tpu_custom_call.1} parent=1 // pred_check
      %p37 = pneg %p36
    $region19: #{tpu_custom_call.1} parent=1 // pred_check_branch
      %39 = sbr.rel (%p37) target = $region21
    $region20: #{tpu_custom_call.1} parent=1 // pred_region
      %40 = vst [vmem:[#allocation7] sm:$0xff] 0.0
    $region21: #{tpu_custom_call.1} parent=1 // pred_fallthru
      _
    %v41 = vld [vmem:[#allocation2] sm:$0xff]
    %v42 = vld [vmem:[#allocation5] sm:$0xff]
    %v43 = vadd.f32 %v41, 1e-10
    %v44 = vlog2.pop %v43
    %v45 = vmul.f32 %v44, 0.6931472
    %v46 = vmul.f32 %v42, %v45
    %47 = vadd.xlane.f32.xlu0 %v46
    %v48 = vpop.xlane.xlu0 %47
    %v49 = vrot.slane %v48, 4
    %v50 = vadd.f32 %v48, %v49
    %v51 = vrot.slane %v50, 2
    %v52 = vadd.f32 %v50, %v51
    %v53 = vrot.slane %v52, 1
    %v54 = vadd.f32 %v52, %v53
    %s55 = vtos %v54
    %v56 = vld [vmem:[#allocation7] sm:$0xff]
    %v57 = vstv %s55
    %v58 = vadd.f32 %v56, %v57
    %59 = vst [vmem:[#allocation7] sm:$0xff] %v58
    // Predicated region
    $region22: #{tpu_custom_call.1} parent=1 // pred_check
      _
    $region23: #{tpu_custom_call.1} parent=1 // pred_check_branch
      %61 = sbr.rel (0) target = $region25
    $region24: #{tpu_custom_call.1} parent=1 // pred_region
      %s63 = ssub.s32 128, 128
      %64 = vsyncadd [#allocation4], %s63
      %s66 = sshll.u32 [#allocation7], 4
      %s67 = int_to_ptr.vmem [resolvable:$true] %s66
      %69 = dma.vmem_to_hbm [thread:$0]  %s67, 128, %s2, [#allocation4]
    $region25: #{tpu_custom_call.1} parent=1 // pred_fallthru
      _
    // Predicated region
    $region26: #{tpu_custom_call.1} parent=1 // pred_check
      _
    $region27: #{tpu_custom_call.1} parent=1 // pred_check_branch
      %71 = sbr.rel (0) target = $region29
    $region28: #{tpu_custom_call.1} parent=1 // pred_region
      %72 = dma.done [#allocation4], 128
    $region29: #{tpu_custom_call.1} parent=1 // pred_fallthru
      _
    %73 = vsyncpa [#allocation3], 1
    %74 = vsyncpa [#allocation6], 1
    %75 = vsyncpa [#allocation4], 1

</llo_original>
